<compile_context>
chip_gen: v7x
topology: tpu7x:2x2x1
jax: 0.10.0
libtpu: 0.0.40
codegen_flags: <defaults>
</compile_context>

<pallas_src>
import jax
import jax.numpy as jnp
from jax.experimental import pallas as pl
from jax.experimental.pallas import tpu as pltpu


def _round_up(x, m):
    return ((x + m - 1) // m) * m


def _choose_tile_m(M, tile_m):
    """Pick a lane-aligned row tile; keep >=2 grid steps for megacore when big."""
    Mp128 = _round_up(max(M, 1), 128)
    tile_m = max(128, min(tile_m, Mp128))
    tile_m = (tile_m // 128) * 128
    # A single giant tile would defeat sharding of the row grid across v7x's
    # two TensorCores; split into (at least) two steps when the problem allows.
    if Mp128 >= 256 and _round_up(M, tile_m) // tile_m < 2:
        tile_m = max(128, (Mp128 // 2) // 128 * 128)
    return tile_m


def _vqprior_kernel(xT_ref,
                    w1_ref, b1_ref,
                    w2_ref, b2_ref,
                    w3_ref, b3_ref,
                    w4_ref, b4_ref,
                    out_ref):
    # xT_ref: (state_dim, TILE_M) bf16 -- rows live on the lane axis.
    f32 = jnp.float32
    bf16 = jnp.bfloat16

    x = xT_ref[...]

    # layers: Linear -> ReLU -> Linear -> ReLU   (feature-major: y = W x + b)
    # bias-add / ReLU stay in f32 (v5e-friendly); dot inputs are bf16 so every
    # matmul is a single-pass bf16 MXU op with f32 accumulation.
    h = jnp.dot(w1_ref[...], x, preferred_element_type=f32) + b1_ref[...]
    h = jnp.maximum(h, 0.0).astype(bf16)
    h = jnp.dot(w2_ref[...], h, preferred_element_type=f32) + b2_ref[...]
    h = jnp.maximum(h, 0.0).astype(bf16)

    # mean_layer: Linear -> ReLU -> Linear
    h = jnp.dot(w3_ref[...], h, preferred_element_type=f32) + b3_ref[...]
    h = jnp.maximum(h, 0.0).astype(bf16)
    m = jnp.dot(w4_ref[...], h, preferred_element_type=f32) + b4_ref[...]

    out_ref[...] = m.astype(out_ref.dtype)   # bf16 lane-dense store


def prepare_params(params, compute_dtype=jnp.bfloat16):
    """Transpose weights to (fan_out, fan_in), cast to bf16 once; biases -> f32 columns."""
    prepped = []
    for (w, b) in params:
        prepped.append((jnp.asarray(w).T.astype(compute_dtype),
                        jnp.asarray(b).reshape(-1, 1).astype(jnp.float32)))
    return prepped


def vqprior_forward_transposed(s0, prepped_params, *, tile_m=16384):
    """Runs the kernel; returns (outT, M, out_dim) with outT: (out_dim, Mp) bf16.

    Downstream consumers that can work in the (out_dim, M) feature-major layout
    should use this directly and skip the wrapper-side transpose entirely.
    """
    (w1, b1), (w2, b2), (w3, b3), (w4, b4) = prepped_params
    B, T, state_dim = s0.shape
    out_dim = w4.shape[0]
    M = B * T

    tile_m = _choose_tile_m(M, tile_m)
    Mp = _round_up(M, tile_m)

    # Flip layout once (rows -> lanes), then pad along M only.
    xT = s0.reshape(M, state_dim).astype(w1.dtype).T        # (state_dim, M) bf16
    if Mp != M:
        xT = jnp.pad(xT, ((0, 0), (0, Mp - M)))

    # Conservative, tile-derived VMEM budget (double-buffered in/out tiles plus
    # f32/bf16 intermediates ~<= 768 B/row); safe on v7x's 64 MiB VMEM.
    vmem_limit = int(min(100 * 1024 * 1024, max(32 * 1024 * 1024, 768 * tile_m)))

    param_bytes = sum(int(w.size) * w.dtype.itemsize + int(b.size) * b.dtype.itemsize
                      for (w, b) in prepped_params)
    cost = pl.CostEstimate(
        flops=2 * Mp * int(w1.size + w2.size + w3.size + w4.size),
        transcendentals=0,
        bytes_accessed=int(Mp * state_dim * 2 + Mp * out_dim * 2 + param_bytes),
    )

    const = lambda i: (0, 0)                 # weights/biases stay VMEM-resident

    outT = pl.pallas_call(
        _vqprior_kernel,
        out_shape=jax.ShapeDtypeStruct((out_dim, Mp), jnp.bfloat16),
        grid=(Mp // tile_m,),
        in_specs=[
            pl.BlockSpec((state_dim, tile_m), lambda i: (0, i)),   # streamed x tile
            pl.BlockSpec(w1.shape, const), pl.BlockSpec(b1.shape, const),
            pl.BlockSpec(w2.shape, const), pl.BlockSpec(b2.shape, const),
            pl.BlockSpec(w3.shape, const), pl.BlockSpec(b3.shape, const),
            pl.BlockSpec(w4.shape, const), pl.BlockSpec(b4.shape, const),
        ],
        out_specs=pl.BlockSpec((out_dim, tile_m), lambda i: (0, i)),  # lane-dense store
        compiler_params=pltpu.CompilerParams(
            dimension_semantics=("parallel",),      # shard rows across TCs on v7x
            vmem_limit_bytes=vmem_limit,
        ),
        cost_estimate=cost,
    )(xT, w1, b1, w2, b2, w3, b3, w4, b4)

    return outT, M, out_dim


def vqprior_forward(s0, prepped_params, *, tile_m=16384, out_dtype=jnp.float32):
    """s0: (B, T, state_dim) f32 -> z_mean: (B, T, z_dim*n_z) in out_dtype."""
    B, T, _ = s0.shape
    outT, M, out_dim = vqprior_forward_transposed(s0, prepped_params, tile_m=tile_m)
    # Transpose back to module layout in bf16 (half the HBM traffic of f32),
    # then cast to the requested dtype (pass out_dtype=bf16 to keep it cheap).
    z = outT[:, :M].T.reshape(B, T, out_dim)
    return z.astype(out_dtype)


def init_params(key, state_dim, z_dim, n_z, h_dim):
    """Deterministic PyTorch-style (uniform +/- 1/sqrt(fan_in)) Linear init."""
    dims = [(state_dim, h_dim), (h_dim, h_dim), (h_dim, h_dim), (h_dim, z_dim * n_z)]
    params = []
    for (fan_in, fan_out) in dims:
        key, kw, kb = jax.random.split(key, 3)
        bound = 1.0 / jnp.sqrt(fan_in)
        w = jax.random.uniform(kw, (fan_in, fan_out), jnp.float32, -bound, bound)
        b = jax.random.uniform(kb, (1, fan_out), jnp.float32, -bound, bound)
        params.append((w, b))
    return params


def vqprior_reference(s0, params, mimic_kernel=False):
    """Pure-JAX reference.

    mimic_kernel=True reproduces the kernel's rounding exactly: bf16 weights,
    bf16 inputs/activations at every dot, f32 accumulation + f32 bias/ReLU,
    bf16 output rounding.
    """
    def mm(a, b):
        if mimic_kernel:
            return jnp.dot(a.astype(jnp.bfloat16), b.astype(jnp.bfloat16),
                           preferred_element_type=jnp.float32)
        return jnp.dot(a, b, precision=jax.lax.Precision.HIGHEST)

    (w1, b1), (w2, b2), (w3, b3), (w4, b4) = params
    h = jnp.maximum(mm(s0, w1) + b1, 0.0)
    h = jnp.maximum(mm(h, w2) + b2, 0.0)
    h = jnp.maximum(mm(h, w3) + b3, 0.0)
    out = mm(h, w4) + b4
    if mimic_kernel:
        out = out.astype(jnp.bfloat16)
    return out.astype(jnp.float32)


if __name__ == "__main__":
    # Small, module-consistent shapes.
    batch, T = 2, 8
    state_dim, z_dim, n_z, h_dim = 4, 4, 4, 32

    key = jax.random.PRNGKey(0)
    key, k_in, k_big = jax.random.split(key, 3)
    s0 = jax.random.normal(k_in, (batch, T, state_dim), jnp.float32)

    params = init_params(key, state_dim, z_dim, n_z, h_dim)
    prepped = prepare_params(params)                 # bf16 weights, cast once

    z_mean = vqprior_forward(s0, prepped)
    jax.block_until_ready(z_mean)
    assert z_mean.shape == (batch, T, z_dim * n_z)

    # Tight check vs a reference that mimics the kernel's bf16 rounding exactly.
    ref_mimic = vqprior_reference(s0, params, mimic_kernel=True)
    assert jnp.allclose(z_mean, ref_mimic, atol=1e-2, rtol=1e-2), \
        float(jnp.max(jnp.abs(z_mean - ref_mimic)))

    # Loose sanity check vs the original f32 module semantics (bf16 drift only).
    ref_f32 = vqprior_reference(s0, params, mimic_kernel=False)
    assert jnp.allclose(z_mean, ref_f32, atol=1e-1, rtol=1e-1), \
        float(jnp.max(jnp.abs(z_mean - ref_f32)))

    # Second smoke at a non-multiple-of-128 row count to exercise padding,
    # multiple grid steps, and the >=2-step megacore tile cap.
    s0_big = jax.random.normal(k_big, (3, 200, state_dim), jnp.float32)
    z_big = vqprior_forward(s0_big, prepped)
    jax.block_until_ready(z_big)
    ref_big = vqprior_reference(s0_big, params, mimic_kernel=True)
    assert z_big.shape == (3, 200, z_dim * n_z)
    assert jnp.allclose(z_big, ref_big, atol=1e-2, rtol=1e-2), \
        float(jnp.max(jnp.abs(z_big - ref_big)))

    print("KERNEL_OK")
</pallas_src>

<mosaic_0001>
module attributes {stable_mosaic.version = 11 : i64} {
  func.func @_vqprior_kernel(%arg0: i32, %arg1: memref<4x128xbf16, #tpu.memory_space<vmem>>, %arg2: memref<32x4xbf16, #tpu.memory_space<vmem>>, %arg3: memref<32x1xf32, #tpu.memory_space<vmem>>, %arg4: memref<32x32xbf16, #tpu.memory_space<vmem>>, %arg5: memref<32x1xf32, #tpu.memory_space<vmem>>, %arg6: memref<32x32xbf16, #tpu.memory_space<vmem>>, %arg7: memref<32x1xf32, #tpu.memory_space<vmem>>, %arg8: memref<16x32xbf16, #tpu.memory_space<vmem>>, %arg9: memref<16x1xf32, #tpu.memory_space<vmem>>, %arg10: memref<16x128xbf16, #tpu.memory_space<vmem>>) attributes {dimension_semantics = [#tpu.dimension_semantics<parallel>], iteration_bounds = array<i64: 1>, scalar_prefetch = 0 : i64, scratch_operands = 0 : i64, tpu.core_type = #tpu.core_type<tc>, window_params = [{transform_indices = @transform_0, window_bounds = array<i64: 4, 128>}, {pipeline_mode = #tpu.pipeline_mode<synchronous>, transform_indices = @transform_1, window_bounds = array<i64: 32, 4>}, {pipeline_mode = #tpu.pipeline_mode<synchronous>, transform_indices = @transform_2, window_bounds = array<i64: 32, 1>}, {pipeline_mode = #tpu.pipeline_mode<synchronous>, transform_indices = @transform_3, window_bounds = array<i64: 32, 32>}, {pipeline_mode = #tpu.pipeline_mode<synchronous>, transform_indices = @transform_4, window_bounds = array<i64: 32, 1>}, {pipeline_mode = #tpu.pipeline_mode<synchronous>, transform_indices = @transform_5, window_bounds = array<i64: 32, 32>}, {pipeline_mode = #tpu.pipeline_mode<synchronous>, transform_indices = @transform_6, window_bounds = array<i64: 32, 1>}, {pipeline_mode = #tpu.pipeline_mode<synchronous>, transform_indices = @transform_7, window_bounds = array<i64: 16, 32>}, {pipeline_mode = #tpu.pipeline_mode<synchronous>, transform_indices = @transform_8, window_bounds = array<i64: 16, 1>}, {transform_indices = @transform_9, window_bounds = array<i64: 16, 128>}]} {
    %c0 = arith.constant 0 : index
    %c0_0 = arith.constant 0 : index
    %0 = vector.load %arg1[%c0, %c0_0] : memref<4x128xbf16, #tpu.memory_space<vmem>>, vector<4x128xbf16>
    %c0_1 = arith.constant 0 : index
    %c0_2 = arith.constant 0 : index
    %1 = vector.load %arg2[%c0_1, %c0_2] : memref<32x4xbf16, #tpu.memory_space<vmem>>, vector<32x4xbf16>
    %cst = arith.constant dense<0.000000e+00> : vector<32x128xf32>
    %2 = tpu.matmul %1, %0, %cst {dimension_numbers = #tpu.dot_dimension_numbers<[1], [0], [0], [1], [0, 0, 1, 1], [], []>} : vector<32x4xbf16>, vector<4x128xbf16>, vector<32x128xf32> -> vector<32x128xf32>
    %c0_3 = arith.constant 0 : index
    %c0_4 = arith.constant 0 : index
    %3 = vector.load %arg3[%c0_3, %c0_4] : memref<32x1xf32, #tpu.memory_space<vmem>>, vector<32x1xf32>
    %4 = vector.broadcast %3 : vector<32x1xf32> to vector<32x128xf32>
    %5 = arith.addf %2, %4 : vector<32x128xf32>
    %cst_5 = arith.constant 0.000000e+00 : f32
    %6 = vector.broadcast %cst_5 : f32 to vector<32x128xf32>
    %7 = arith.maximumf %5, %6 : vector<32x128xf32>
    %8 = arith.truncf %7 : vector<32x128xf32> to vector<32x128xbf16>
    %c0_6 = arith.constant 0 : index
    %c0_7 = arith.constant 0 : index
    %9 = vector.load %arg4[%c0_6, %c0_7] : memref<32x32xbf16, #tpu.memory_space<vmem>>, vector<32x32xbf16>
    %cst_8 = arith.constant dense<0.000000e+00> : vector<32x128xf32>
    %10 = tpu.matmul %9, %8, %cst_8 {dimension_numbers = #tpu.dot_dimension_numbers<[1], [0], [0], [1], [0, 0, 1, 1], [], []>} : vector<32x32xbf16>, vector<32x128xbf16>, vector<32x128xf32> -> vector<32x128xf32>
    %c0_9 = arith.constant 0 : index
    %c0_10 = arith.constant 0 : index
    %11 = vector.load %arg5[%c0_9, %c0_10] : memref<32x1xf32, #tpu.memory_space<vmem>>, vector<32x1xf32>
    %12 = vector.broadcast %11 : vector<32x1xf32> to vector<32x128xf32>
    %13 = arith.addf %10, %12 : vector<32x128xf32>
    %cst_11 = arith.constant 0.000000e+00 : f32
    %14 = vector.broadcast %cst_11 : f32 to vector<32x128xf32>
    %15 = arith.maximumf %13, %14 : vector<32x128xf32>
    %16 = arith.truncf %15 : vector<32x128xf32> to vector<32x128xbf16>
    %c0_12 = arith.constant 0 : index
    %c0_13 = arith.constant 0 : index
    %17 = vector.load %arg6[%c0_12, %c0_13] : memref<32x32xbf16, #tpu.memory_space<vmem>>, vector<32x32xbf16>
    %cst_14 = arith.constant dense<0.000000e+00> : vector<32x128xf32>
    %18 = tpu.matmul %17, %16, %cst_14 {dimension_numbers = #tpu.dot_dimension_numbers<[1], [0], [0], [1], [0, 0, 1, 1], [], []>} : vector<32x32xbf16>, vector<32x128xbf16>, vector<32x128xf32> -> vector<32x128xf32>
    %c0_15 = arith.constant 0 : index
    %c0_16 = arith.constant 0 : index
    %19 = vector.load %arg7[%c0_15, %c0_16] : memref<32x1xf32, #tpu.memory_space<vmem>>, vector<32x1xf32>
    %20 = vector.broadcast %19 : vector<32x1xf32> to vector<32x128xf32>
    %21 = arith.addf %18, %20 : vector<32x128xf32>
    %cst_17 = arith.constant 0.000000e+00 : f32
    %22 = vector.broadcast %cst_17 : f32 to vector<32x128xf32>
    %23 = arith.maximumf %21, %22 : vector<32x128xf32>
    %24 = arith.truncf %23 : vector<32x128xf32> to vector<32x128xbf16>
    %c0_18 = arith.constant 0 : index
    %c0_19 = arith.constant 0 : index
    %25 = vector.load %arg8[%c0_18, %c0_19] : memref<16x32xbf16, #tpu.memory_space<vmem>>, vector<16x32xbf16>
    %cst_20 = arith.constant dense<0.000000e+00> : vector<16x128xf32>
    %26 = tpu.matmul %25, %24, %cst_20 {dimension_numbers = #tpu.dot_dimension_numbers<[1], [0], [0], [1], [0, 0, 1, 1], [], []>} : vector<16x32xbf16>, vector<32x128xbf16>, vector<16x128xf32> -> vector<16x128xf32>
    %c0_21 = arith.constant 0 : index
    %c0_22 = arith.constant 0 : index
    %27 = vector.load %arg9[%c0_21, %c0_22] : memref<16x1xf32, #tpu.memory_space<vmem>>, vector<16x1xf32>
    %28 = vector.broadcast %27 : vector<16x1xf32> to vector<16x128xf32>
    %29 = arith.addf %26, %28 : vector<16x128xf32>
    %30 = arith.truncf %29 : vector<16x128xf32> to vector<16x128xbf16>
    %c0_23 = arith.constant 0 : index
    %c0_24 = arith.constant 0 : index
    %31 = vector.load %arg10[%c0_23, %c0_24] : memref<16x128xbf16, #tpu.memory_space<vmem>>, vector<16x128xbf16>
    tpu.vector_store %arg10[%c0_23, %c0_24], %30 {strides = array<i32>} : memref<16x128xbf16, #tpu.memory_space<vmem>>, vector<16x128xbf16>,
    return
  }
  func.func @transform_0(%arg0: i32) -> (i32, i32) {
    %c0_i32 = arith.constant 0 : i32
    %c0_i32_0 = arith.constant 0 : i32
    return %c0_i32, %arg0 : i32, i32
  }
  func.func @transform_1(%arg0: i32) -> (i32, i32) {
    %c0_i32 = arith.constant 0 : i32
    %c0_i32_0 = arith.constant 0 : i32
    %c0_i32_1 = arith.constant 0 : i32
    return %c0_i32, %c0_i32_0 : i32, i32
  }
  func.func @transform_2(%arg0: i32) -> (i32, i32) {
    %c0_i32 = arith.constant 0 : i32
    %c0_i32_0 = arith.constant 0 : i32
    %c0_i32_1 = arith.constant 0 : i32
    return %c0_i32, %c0_i32_0 : i32, i32
  }
  func.func @transform_3(%arg0: i32) -> (i32, i32) {
    %c0_i32 = arith.constant 0 : i32
    %c0_i32_0 = arith.constant 0 : i32
    %c0_i32_1 = arith.constant 0 : i32
    return %c0_i32, %c0_i32_0 : i32, i32
  }
  func.func @transform_4(%arg0: i32) -> (i32, i32) {
    %c0_i32 = arith.constant 0 : i32
    %c0_i32_0 = arith.constant 0 : i32
    %c0_i32_1 = arith.constant 0 : i32
    return %c0_i32, %c0_i32_0 : i32, i32
  }
  func.func @transform_5(%arg0: i32) -> (i32, i32) {
    %c0_i32 = arith.constant 0 : i32
    %c0_i32_0 = arith.constant 0 : i32
    %c0_i32_1 = arith.constant 0 : i32
    return %c0_i32, %c0_i32_0 : i32, i32
  }
  func.func @transform_6(%arg0: i32) -> (i32, i32) {
    %c0_i32 = arith.constant 0 : i32
    %c0_i32_0 = arith.constant 0 : i32
    %c0_i32_1 = arith.constant 0 : i32
    return %c0_i32, %c0_i32_0 : i32, i32
  }
  func.func @transform_7(%arg0: i32) -> (i32, i32) {
    %c0_i32 = arith.constant 0 : i32
    %c0_i32_0 = arith.constant 0 : i32
    %c0_i32_1 = arith.constant 0 : i32
    return %c0_i32, %c0_i32_0 : i32, i32
  }
  func.func @transform_8(%arg0: i32) -> (i32, i32) {
    %c0_i32 = arith.constant 0 : i32
    %c0_i32_0 = arith.constant 0 : i32
    %c0_i32_1 = arith.constant 0 : i32
    return %c0_i32, %c0_i32_0 : i32, i32
  }
  func.func @transform_9(%arg0: i32) -> (i32, i32) {
    %c0_i32 = arith.constant 0 : i32
    %c0_i32_0 = arith.constant 0 : i32
    return %c0_i32, %arg0 : i32, i32
  }
}

</mosaic_0001>

<llo_original>
// kernel: tpu_custom_call.1
$region0: #{tpu_custom_call.1}
  #allocation0 [shape = 'u32[]', space=smem, size = 0x4, offset = 0x4, fixed_abs, tag = 'smem constant byte address 0x4 - core index']
  #allocation1 [shape = 'u32[144,128]{1,0:T(1,128)}', space=vmem, size = 0x12000, scoped, tag = 'internal scratch']
  %s0 = inlined_call_operand.vmem [shape: bf16[4,128], index: 0, kind: input, shape index: {}]
  %s1 = inlined_call_operand.vmem [shape: bf16[32,4], index: 1, kind: input, shape index: {}]
  %s2 = inlined_call_operand.vmem [shape: f32[32,1], index: 2, kind: input, shape index: {}]
  %s3 = inlined_call_operand.vmem [shape: bf16[32,32], index: 3, kind: input, shape index: {}]
  %s4 = inlined_call_operand.vmem [shape: f32[32,1], index: 4, kind: input, shape index: {}]
  %s5 = inlined_call_operand.vmem [shape: bf16[32,32], index: 5, kind: input, shape index: {}]
  %s6 = inlined_call_operand.vmem [shape: f32[32,1], index: 6, kind: input, shape index: {}]
  %s7 = inlined_call_operand.vmem [shape: bf16[16,32], index: 7, kind: input, shape index: {}]
  %s8 = inlined_call_operand.vmem [shape: f32[16,1], index: 8, kind: input, shape index: {}]
  %s9 = inlined_call_operand.hbm [shape: bf16[16,128], index: 9, kind: output, shape index: {}]
  %s10 = sld [smem:[#allocation0]]
  $region46: #{tpu_custom_call.1} parent=0
    _
  %s12 = ssub.s32 1, %s10
  %s13 = scalar_select 0, %s12, %s10
  $region1: #{tpu_custom_call.1} parent=0
    #allocation2 [shape = 'u8[4096]{0}', space=vmem, size = 0x1000, scoped, tag = 'output window, operand 0, single buffered']
    #allocation3 [shape = 's32[1]{0}', space=sflag, size = 0x4, scoped, tag = 'scoped memory for tpu_custom_call.1']
    %14 = vsyncpa [#allocation3], 0
    // Predicated region
    $region2: #{tpu_custom_call.1} parent=1 // pred_check
      _
    $region3: #{tpu_custom_call.1} parent=1 // pred_check_branch
      %16 = sbr.rel (0) target = $region5
    $region4: #{tpu_custom_call.1} parent=1 // pred_region
      _
    $region5: #{tpu_custom_call.1} parent=1 // pred_fallthru
      _
    // Predicated region
    $region6: #{tpu_custom_call.1} parent=1 // pred_check
      _
    $region7: #{tpu_custom_call.1} parent=1 // pred_check_branch
      %18 = sbr.rel (0) target = $region9
    $region8: #{tpu_custom_call.1} parent=1 // pred_region
      _
    $region9: #{tpu_custom_call.1} parent=1 // pred_fallthru
      _
    // Predicated region
    $region10: #{tpu_custom_call.1} parent=1 // pred_check
      _
    $region11: #{tpu_custom_call.1} parent=1 // pred_check_branch
      %20 = sbr.rel (0) target = $region13
    $region12: #{tpu_custom_call.1} parent=1 // pred_region
      _
    $region13: #{tpu_custom_call.1} parent=1 // pred_fallthru
      _
    // Predicated region
    $region14: #{tpu_custom_call.1} parent=1 // pred_check
      _
    $region15: #{tpu_custom_call.1} parent=1 // pred_check_branch
      %22 = sbr.rel (0) target = $region17
    $region16: #{tpu_custom_call.1} parent=1 // pred_region
      _
    $region17: #{tpu_custom_call.1} parent=1 // pred_fallthru
      _
    // Predicated region
    $region18: #{tpu_custom_call.1} parent=1 // pred_check
      _
    $region19: #{tpu_custom_call.1} parent=1 // pred_check_branch
      %24 = sbr.rel (0) target = $region21
    $region20: #{tpu_custom_call.1} parent=1 // pred_region
      _
    $region21: #{tpu_custom_call.1} parent=1 // pred_fallthru
      _
    // Predicated region
    $region22: #{tpu_custom_call.1} parent=1 // pred_check
      _
    $region23: #{tpu_custom_call.1} parent=1 // pred_check_branch
      %26 = sbr.rel (0) target = $region25
    $region24: #{tpu_custom_call.1} parent=1 // pred_region
      _
    $region25: #{tpu_custom_call.1} parent=1 // pred_fallthru
      _
    // Predicated region
    $region26: #{tpu_custom_call.1} parent=1 // pred_check
      _
    $region27: #{tpu_custom_call.1} parent=1 // pred_check_branch
      %28 = sbr.rel (0) target = $region29
    $region28: #{tpu_custom_call.1} parent=1 // pred_region
      _
    $region29: #{tpu_custom_call.1} parent=1 // pred_fallthru
      _
    // Predicated region
    $region30: #{tpu_custom_call.1} parent=1 // pred_check
      _
    $region31: #{tpu_custom_call.1} parent=1 // pred_check_branch
      %30 = sbr.rel (0) target = $region33
    $region32: #{tpu_custom_call.1} parent=1 // pred_region
      _
    $region33: #{tpu_custom_call.1} parent=1 // pred_fallthru
      _
    // Predicated region
    $region34: #{tpu_custom_call.1} parent=1 // pred_check
      _
    $region35: #{tpu_custom_call.1} parent=1 // pred_check_branch
      %32 = sbr.rel (0) target = $region37
    $region36: #{tpu_custom_call.1} parent=1 // pred_region
      _
    $region37: #{tpu_custom_call.1} parent=1 // pred_fallthru
      _
    %v34 = vld [vmem:[%s0] sm:$0x3]
    %v35 = vld [vmem:[%s1] sm:$0xf]
    %v36 = vld [vmem:[%s1 + $0x4] sm:$0xf]
    %v37 = vld [vmem:[%s1 + $0x8] sm:$0xf]
    %v38 = vld [vmem:[%s1 + $0xc] sm:$0xf]
    %v39 = vld [vmem:[%s2] sm:$0xff]
    %v40 = vld [vmem:[%s2 + $0x8] sm:$0xff]
    %v41 = vld [vmem:[%s2 + $0x10] sm:$0xff]
    %v42 = vld [vmem:[%s2 + $0x18] sm:$0xff]
    %44 = vset.pattern.permute.xlu0 0
    %45 = vperm.xlu0 %44, %v39
    %v46 = vpop.permute.xlu0 %45
    %49 = vset.pattern.permute.xlu0 0
    %50 = vperm.xlu0 %49, %v40
    %v51 = vpop.permute.xlu0 %50
    %54 = vset.pattern.permute.xlu0 0
    %55 = vperm.xlu0 %54, %v41
    %v56 = vpop.permute.xlu0 %55
    %59 = vset.pattern.permute.xlu0 0
    %60 = vperm.xlu0 %59, %v42
    %v61 = vpop.permute.xlu0 %60
    %v67 = vunpack.c.l.b16 %v35
    %v68 = vunpack.c.l.b16 %v36
    %v69 = vunpack.c.l.b16 %v37
    %v70 = vunpack.c.l.b16 %v38
    %v71 = vpack.c.b16 %v68, %v67
    %v72 = vpack.c.b16 %v70, %v69
    %vm73 = vcmask 31744
    %v75 = vsel %vm73, %v71, 0
    %v78 = vsel %vm73, %v72, 0
    %vm80 = vcmask 1041408
    %v82 = vsel %vm80, %v34, 0
    %84 = vmatprep.subr.bf16.mxu0 0
    %85 = vmatpush1.bf16.msra.mxu0 %v82
    %86 = vmatprep.subr.bf16.mxu0 0
    %87 = vmatpush1.bf16.msra.mxu0 0
    %88 = vmatprep.subr.bf16.mxu0 0
    %89 = vmatpush1.bf16.msra.mxu0 0
    %90 = vmatprep.subr.bf16.mxu0 0
    %91 = vmatpush1.bf16.msra.mxu0 0
    %92 = vmatprep.subr.bf16.mxu0 0
    %93 = vmatpush1.bf16.msra.mxu0 0
    %94 = vmatprep.subr.bf16.mxu0 0
    %95 = vmatpush1.bf16.msra.mxu0 0
    %96 = vmatprep.subr.bf16.mxu0 0
    %97 = vmatpush1.bf16.msra.mxu0 0
    %98 = vmatprep.subr.bf16.mxu0 0
    %99 = vmatpush1.bf16.msra.mxu0 0
    %100 = vmatprep.subr.bf16.mxu0 0
    %101 = vmatpush1.bf16.msra.mxu0 0
    %102 = vmatprep.subr.bf16.mxu0 0
    %103 = vmatpush1.bf16.msra.mxu0 0
    %104 = vmatprep.subr.bf16.mxu0 0
    %105 = vmatpush1.bf16.msra.mxu0 0
    %106 = vmatprep.subr.bf16.mxu0 0
    %107 = vmatpush1.bf16.msra.mxu0 0
    %108 = vmatprep.subr.bf16.mxu0 0
    %109 = vmatpush1.bf16.msra.mxu0 0
    %110 = vmatprep.subr.bf16.mxu0 0
    %111 = vmatpush1.bf16.msra.mxu0 0
    %112 = vmatprep.subr.bf16.mxu0 0
    %113 = vmatpush1.bf16.msra.mxu0 0
    %114 = vmatprep.subr.bf16.mxu0 0
    %115 = vmatpush1.bf16.msra.mxu0 0
    %116 = vmatprep.mubr.bf16.mxu0 0
    %117 = vmatmul.mubr.bf16.gmra.mrb[0].mxu0 %v75
    %v118 = vpop.f32.mrb[0].mxu0
    %v119 = vadd.f32 %v46, %v118
    %v120 = vpop.f32.mrb[0].mxu0
    %v121 = vpop.f32.mrb[0].mxu0
    %v122 = vadd.f32 %v51, %v121
    %v123 = vpop.f32.mrb[0].mxu0
    %124 = vmatprep.mubr.bf16.mxu0 0
    %125 = vmatmul.mubr.bf16.gmra.mrb[0].mxu0 %v78
    %v126 = vpop.f32.mrb[0].mxu0
    %v127 = vadd.f32 %v56, %v126
    %v128 = vpop.f32.mrb[0].mxu0
    %v129 = vpop.f32.mrb[0].mxu0
    %v130 = vadd.f32 %v61, %v129
    %v131 = vpop.f32.mrb[0].mxu0
    %132 = vdwg.mxu0
    %v133 = vmax.f32 %v119, 0.0
    %v134 = vmax.f32 %v122, 0.0
    %v135 = vmax.f32 %v127, 0.0
    %v136 = vmax.f32 %v130, 0.0
    %v137 = vpack.c.bf16 %v134, %v133
    %v138 = vpack.c.bf16 %v136, %v135
    %v139 = vld [vmem:[%s3] sm:$0xf]
    %v140 = vld [vmem:[%s3 + $0x4] sm:$0xf]
    %v141 = vld [vmem:[%s3 + $0x8] sm:$0xf]
    %v142 = vld [vmem:[%s3 + $0xc] sm:$0xf]
    %v143 = vld [vmem:[%s4] sm:$0xff]
    %v144 = vld [vmem:[%s4 + $0x8] sm:$0xff]
    %v145 = vld [vmem:[%s4 + $0x10] sm:$0xff]
    %v146 = vld [vmem:[%s4 + $0x18] sm:$0xff]
    %148 = vset.pattern.permute.xlu0 0
    %149 = vperm.xlu0 %148, %v143
    %v150 = vpop.permute.xlu0 %149
    %153 = vset.pattern.permute.xlu0 0
    %154 = vperm.xlu0 %153, %v144
    %v155 = vpop.permute.xlu0 %154
    %158 = vset.pattern.permute.xlu0 0
    %159 = vperm.xlu0 %158, %v145
    %v160 = vpop.permute.xlu0 %159
    %163 = vset.pattern.permute.xlu0 0
    %164 = vperm.xlu0 %163, %v146
    %v165 = vpop.permute.xlu0 %164
    %v171 = vunpack.c.l.b16 %v139
    %v172 = vunpack.c.l.b16 %v140
    %v173 = vunpack.c.l.b16 %v141
    %v174 = vunpack.c.l.b16 %v142
    %v175 = vpack.c.b16 %v172, %v171
    %v176 = vpack.c.b16 %v174, %v173
    %vm177 = vcmask 261120
    %v179 = vsel %vm177, %v175, 0
    %v182 = vsel %vm177, %v176, 0
    %184 = vmatprep.subr.bf16.mxu0 0
    %185 = vmatpush1.bf16.msra.mxu0 %v137
    %186 = vmatprep.subr.bf16.mxu0 0
    %187 = vmatpush1.bf16.msra.mxu0 %v138
    %188 = vmatprep.subr.bf16.mxu0 0
    %189 = vmatpush1.bf16.msra.mxu0 0
    %190 = vmatprep.subr.bf16.mxu0 0
    %191 = vmatpush1.bf16.msra.mxu0 0
    %192 = vmatprep.subr.bf16.mxu0 0
    %193 = vmatpush1.bf16.msra.mxu0 0
    %194 = vmatprep.subr.bf16.mxu0 0
    %195 = vmatpush1.bf16.msra.mxu0 0
    %196 = vmatprep.subr.bf16.mxu0 0
    %197 = vmatpush1.bf16.msra.mxu0 0
    %198 = vmatprep.subr.bf16.mxu0 0
    %199 = vmatpush1.bf16.msra.mxu0 0
    %200 = vmatprep.subr.bf16.mxu0 0
    %201 = vmatpush1.bf16.msra.mxu0 0
    %202 = vmatprep.subr.bf16.mxu0 0
    %203 = vmatpush1.bf16.msra.mxu0 0
    %204 = vmatprep.subr.bf16.mxu0 0
    %205 = vmatpush1.bf16.msra.mxu0 0
    %206 = vmatprep.subr.bf16.mxu0 0
    %207 = vmatpush1.bf16.msra.mxu0 0
    %208 = vmatprep.subr.bf16.mxu0 0
    %209 = vmatpush1.bf16.msra.mxu0 0
    %210 = vmatprep.subr.bf16.mxu0 0
    %211 = vmatpush1.bf16.msra.mxu0 0
    %212 = vmatprep.subr.bf16.mxu0 0
    %213 = vmatpush1.bf16.msra.mxu0 0
    %214 = vmatprep.subr.bf16.mxu0 0
    %215 = vmatpush1.bf16.msra.mxu0 0
    %216 = vmatprep.mubr.bf16.mxu0 0
    %217 = vmatmul.mubr.bf16.gmra.mrb[0].mxu0 %v179
    %v218 = vpop.f32.mrb[0].mxu0
    %v219 = vadd.f32 %v150, %v218
    %v220 = vpop.f32.mrb[0].mxu0
    %v221 = vpop.f32.mrb[0].mxu0
    %v222 = vadd.f32 %v155, %v221
    %v223 = vpop.f32.mrb[0].mxu0
    %224 = vmatprep.mubr.bf16.mxu0 0
    %225 = vmatmul.mubr.bf16.gmra.mrb[0].mxu0 %v182
    %v226 = vpop.f32.mrb[0].mxu0
    %v227 = vadd.f32 %v160, %v226
    %v228 = vpop.f32.mrb[0].mxu0
    %v229 = vpop.f32.mrb[0].mxu0
    %v230 = vadd.f32 %v165, %v229
    %v231 = vpop.f32.mrb[0].mxu0
    %232 = vdwg.mxu0
    %v233 = vmax.f32 %v219, 0.0
    %v234 = vmax.f32 %v222, 0.0
    %v235 = vmax.f32 %v227, 0.0
    %v236 = vmax.f32 %v230, 0.0
    %v237 = vpack.c.bf16 %v234, %v233
    %v238 = vpack.c.bf16 %v236, %v235
    %v239 = vld [vmem:[%s5] sm:$0xf]
    %v240 = vld [vmem:[%s5 + $0x4] sm:$0xf]
    %v241 = vld [vmem:[%s5 + $0x8] sm:$0xf]
    %v242 = vld [vmem:[%s5 + $0xc] sm:$0xf]
    %v243 = vld [vmem:[%s6] sm:$0xff]
    %v244 = vld [vmem:[%s6 + $0x8] sm:$0xff]
    %v245 = vld [vmem:[%s6 + $0x10] sm:$0xff]
    %v246 = vld [vmem:[%s6 + $0x18] sm:$0xff]
    %248 = vset.pattern.permute.xlu0 0
    %249 = vperm.xlu0 %248, %v243
    %v250 = vpop.permute.xlu0 %249
    %253 = vset.pattern.permute.xlu0 0
    %254 = vperm.xlu0 %253, %v244
    %v255 = vpop.permute.xlu0 %254
    %258 = vset.pattern.permute.xlu0 0
    %259 = vperm.xlu0 %258, %v245
    %v260 = vpop.permute.xlu0 %259
    %263 = vset.pattern.permute.xlu0 0
    %264 = vperm.xlu0 %263, %v246
    %v265 = vpop.permute.xlu0 %264
    %v271 = vunpack.c.l.b16 %v239
    %v272 = vunpack.c.l.b16 %v240
    %v273 = vunpack.c.l.b16 %v241
    %v274 = vunpack.c.l.b16 %v242
    %v275 = vpack.c.b16 %v272, %v271
    %v276 = vpack.c.b16 %v274, %v273
    %v278 = vsel %vm177, %v275, 0
    %v281 = vsel %vm177, %v276, 0
    %283 = vmatprep.subr.bf16.mxu0 0
    %284 = vmatpush1.bf16.msra.mxu0 %v237
    %285 = vmatprep.subr.bf16.mxu0 0
    %286 = vmatpush1.bf16.msra.mxu0 %v238
    %287 = vmatprep.subr.bf16.mxu0 0
    %288 = vmatpush1.bf16.msra.mxu0 0
    %289 = vmatprep.subr.bf16.mxu0 0
    %290 = vmatpush1.bf16.msra.mxu0 0
    %291 = vmatprep.subr.bf16.mxu0 0
    %292 = vmatpush1.bf16.msra.mxu0 0
    %293 = vmatprep.subr.bf16.mxu0 0
    %294 = vmatpush1.bf16.msra.mxu0 0
    %295 = vmatprep.subr.bf16.mxu0 0
    %296 = vmatpush1.bf16.msra.mxu0 0
    %297 = vmatprep.subr.bf16.mxu0 0
    %298 = vmatpush1.bf16.msra.mxu0 0
    %299 = vmatprep.subr.bf16.mxu0 0
    %300 = vmatpush1.bf16.msra.mxu0 0
    %301 = vmatprep.subr.bf16.mxu0 0
    %302 = vmatpush1.bf16.msra.mxu0 0
    %303 = vmatprep.subr.bf16.mxu0 0
    %304 = vmatpush1.bf16.msra.mxu0 0
    %305 = vmatprep.subr.bf16.mxu0 0
    %306 = vmatpush1.bf16.msra.mxu0 0
    %307 = vmatprep.subr.bf16.mxu0 0
    %308 = vmatpush1.bf16.msra.mxu0 0
    %309 = vmatprep.subr.bf16.mxu0 0
    %310 = vmatpush1.bf16.msra.mxu0 0
    %311 = vmatprep.subr.bf16.mxu0 0
    %312 = vmatpush1.bf16.msra.mxu0 0
    %313 = vmatprep.subr.bf16.mxu0 0
    %314 = vmatpush1.bf16.msra.mxu0 0
    %315 = vmatprep.mubr.bf16.mxu0 0
    %316 = vmatmul.mubr.bf16.gmra.mrb[0].mxu0 %v278
    %v317 = vpop.f32.mrb[0].mxu0
    %v318 = vadd.f32 %v250, %v317
    %v319 = vpop.f32.mrb[0].mxu0
    %v320 = vpop.f32.mrb[0].mxu0
    %v321 = vadd.f32 %v255, %v320
    %v322 = vpop.f32.mrb[0].mxu0
    %323 = vmatprep.mubr.bf16.mxu0 0
    %324 = vmatmul.mubr.bf16.gmra.mrb[0].mxu0 %v281
    %v325 = vpop.f32.mrb[0].mxu0
    %v326 = vadd.f32 %v260, %v325
    %v327 = vpop.f32.mrb[0].mxu0
    %v328 = vpop.f32.mrb[0].mxu0
    %v329 = vadd.f32 %v265, %v328
    %v330 = vpop.f32.mrb[0].mxu0
    %331 = vdwg.mxu0
    %v332 = vmax.f32 %v318, 0.0
    %v333 = vmax.f32 %v321, 0.0
    %v334 = vmax.f32 %v326, 0.0
    %v335 = vmax.f32 %v329, 0.0
    %v336 = vpack.c.bf16 %v333, %v332
    %v337 = vpack.c.bf16 %v335, %v334
    %v338 = vld [vmem:[%s7] sm:$0xf]
    %v339 = vld [vmem:[%s7 + $0x4] sm:$0xf]
    %v340 = vld [vmem:[%s8] sm:$0xff]
    %v341 = vld [vmem:[%s8 + $0x8] sm:$0xff]
    %343 = vset.pattern.permute.xlu0 0
    %344 = vperm.xlu0 %343, %v340
    %v345 = vpop.permute.xlu0 %344
    %348 = vset.pattern.permute.xlu0 0
    %349 = vperm.xlu0 %348, %v341
    %v350 = vpop.permute.xlu0 %349
    %v354 = vunpack.c.l.b16 %v338
    %v355 = vunpack.c.l.b16 %v339
    %v356 = vpack.c.b16 %v355, %v354
    %v358 = vsel %vm177, %v356, 0
    %360 = vmatprep.subr.bf16.mxu0 0
    %361 = vmatpush1.bf16.msra.mxu0 %v336
    %362 = vmatprep.subr.bf16.mxu0 0
    %363 = vmatpush1.bf16.msra.mxu0 %v337
    %364 = vmatprep.subr.bf16.mxu0 0
    %365 = vmatpush1.bf16.msra.mxu0 0
    %366 = vmatprep.subr.bf16.mxu0 0
    %367 = vmatpush1.bf16.msra.mxu0 0
    %368 = vmatprep.subr.bf16.mxu0 0
    %369 = vmatpush1.bf16.msra.mxu0 0
    %370 = vmatprep.subr.bf16.mxu0 0
    %371 = vmatpush1.bf16.msra.mxu0 0
    %372 = vmatprep.subr.bf16.mxu0 0
    %373 = vmatpush1.bf16.msra.mxu0 0
    %374 = vmatprep.subr.bf16.mxu0 0
    %375 = vmatpush1.bf16.msra.mxu0 0
    %376 = vmatprep.subr.bf16.mxu0 0
    %377 = vmatpush1.bf16.msra.mxu0 0
    %378 = vmatprep.subr.bf16.mxu0 0
    %379 = vmatpush1.bf16.msra.mxu0 0
    %380 = vmatprep.subr.bf16.mxu0 0
    %381 = vmatpush1.bf16.msra.mxu0 0
    %382 = vmatprep.subr.bf16.mxu0 0
    %383 = vmatpush1.bf16.msra.mxu0 0
    %384 = vmatprep.subr.bf16.mxu0 0
    %385 = vmatpush1.bf16.msra.mxu0 0
    %386 = vmatprep.subr.bf16.mxu0 0
    %387 = vmatpush1.bf16.msra.mxu0 0
    %388 = vmatprep.subr.bf16.mxu0 0
    %389 = vmatpush1.bf16.msra.mxu0 0
    %390 = vmatprep.subr.bf16.mxu0 0
    %391 = vmatpush1.bf16.msra.mxu0 0
    %392 = vmatprep.mubr.bf16.mxu0 0
    %393 = vmatmul.mubr.bf16.gmra.mrb[0].mxu0 %v358
    %v394 = vpop.f32.mrb[0].mxu0
    %v395 = vadd.f32 %v345, %v394
    %v396 = vpop.f32.mrb[0].mxu0
    %v397 = vpop.f32.mrb[0].mxu0
    %v398 = vadd.f32 %v350, %v397
    %v399 = vpop.f32.mrb[0].mxu0
    %400 = vdwg.mxu0
    %v401 = vpack.c.bf16 %v398, %v395
    %v403 = vunpack.c.l.b16 %v401
    %v404 = vunpack.c.h.b16 %v401
    %v405 = vpack.c.b16 %v403, %v403
    %v406 = vpack.c.b16 %v404, %v404
    %409 = vst [vmem:[#allocation2] sm:$0xf] %v405
    %410 = vst [vmem:[#allocation2 + $0x4] sm:$0xf] %v406
    // Predicated region
    $region38: #{tpu_custom_call.1} parent=1 // pred_check
      _
    $region39: #{tpu_custom_call.1} parent=1 // pred_check_branch
      %412 = sbr.rel (0) target = $region41
    $region40: #{tpu_custom_call.1} parent=1 // pred_region
      %s414 = ssub.s32 128, 128
      %415 = vsyncadd [#allocation3], %s414
      %s416 = sshll.u32 [#allocation2], 4
      %s417 = int_to_ptr.vmem [resolvable:$true] %s416
      %422 = dma.vmem_to_hbm [thread:$0]  %s417, 128, %s9, [#allocation3], 64, 64, 4
    $region41: #{tpu_custom_call.1} parent=1 // pred_fallthru
      _
    // Predicated region
    $region42: #{tpu_custom_call.1} parent=1 // pred_check
      _
    $region43: #{tpu_custom_call.1} parent=1 // pred_check_branch
      %424 = sbr.rel (0) target = $region45
    $region44: #{tpu_custom_call.1} parent=1 // pred_region
      %425 = dma.done [#allocation3], 128
    $region45: #{tpu_custom_call.1} parent=1 // pred_fallthru
      _
    %426 = vsyncpa [#allocation3], 1

</llo_original>
